<compile_context>
chip_gen: v7x
topology: tpu7x:2x2x1
jax: 0.10.0
libtpu: 0.0.40
codegen_flags: <defaults>
</compile_context>

<pallas_src>
import jax
import jax.numpy as jnp
from jax.experimental import pallas as pl
from jax.experimental.pallas import tpu as pltpu

NUM_CLASSES = 2


def _round_up(n, m):
    return ((n + m - 1) // m) * m


def _pad_axis(x, axis, target):
    pad = target - x.shape[axis]
    if pad <= 0:
        return x
    widths = [(0, 0)] * x.ndim
    widths[axis] = (0, pad)
    return jnp.pad(x, widths)


# ---------------------------------------------------------------------------
# Stage 1: Conv1d(k=3, pad=1) fused with the LSTM input projection
# ---------------------------------------------------------------------------
def conv_gates_kernel(x_ref,      # (1, S, H)        f32  bert hidden states (one batch)
                      wc_ref,     # (H, 3*Cp)        bf16 conv taps [W0 | W1 | W2] (transposed)
                      bc_ref,     # (1, Cp)          f32  conv bias (padded)
                      wih_ref,    # (Cp, 4*HLp)      bf16 lstm W_ih^T (gate-padded)
                      bl_ref,     # (1, 4*HLp)       f32  b_ih + b_hh (gate-padded)
                      gx_ref):    # (1, S, 4*HLp)    f32  output: input-projected gates
    S = x_ref.shape[1]
    Cp = bc_ref.shape[1]

    xs = x_ref[0].astype(jnp.bfloat16)                               # (S, H)
    # one tall matmul for all three conv taps (lane-aligned column blocks)
    p = jnp.dot(xs, wc_ref[...], preferred_element_type=jnp.float32)  # (S, 3*Cp)
    p0 = p[:, 0 * Cp:1 * Cp]   # tap applied to x[s-1]
    p1 = p[:, 1 * Cp:2 * Cp]   # tap applied to x[s]
    p2 = p[:, 2 * Cp:3 * Cp]   # tap applied to x[s+1]

    # shift the matmul output rows (single zero row, no padded copy of x)
    zrow = jnp.zeros((1, Cp), jnp.float32)
    left = jnp.concatenate([zrow, p0[:-1, :]], axis=0)   # row s <- p0[s-1]
    right = jnp.concatenate([p2[1:, :], zrow], axis=0)   # row s <- p2[s+1]
    conv = p1 + left + right + bc_ref[...]               # (S, Cp) f32

    # hoisted LSTM input projection: one tall MXU matmul for the whole sequence
    gx = jnp.dot(conv.astype(jnp.bfloat16), wih_ref[...],
                 preferred_element_type=jnp.float32) + bl_ref[...]   # (S, 4*HLp)
    gx_ref[0] = gx


# ---------------------------------------------------------------------------
# Stage 2: LSTM recurrence (only h @ W_hh per step) + classifier on last step
# ---------------------------------------------------------------------------
def lstm_head_kernel(gx_ref,     # (B, ts, 4*HLp)  f32  precomputed input gates (chunk)
                     whh_ref,    # (HLp, 4*HLp)    bf16 lstm W_hh^T (gate-padded)
                     wcls_ref,   # (HLp, NC)       bf16 classifier weight^T
                     bcls_ref,   # (1, NC)         f32  classifier bias
                     out_ref,    # (B, NC)         f32  logits
                     h_ref,      # scratch (B, HLp) f32
                     c_ref):     # scratch (B, HLp) f32
    t = pl.program_id(0)
    ts = gx_ref.shape[1]
    HLp = whh_ref.shape[0]

    @pl.when(t == 0)
    def _():
        h_ref[...] = jnp.zeros_like(h_ref)
        c_ref[...] = jnp.zeros_like(c_ref)

    whh = whh_ref[...]
    gx = gx_ref[...]            # (B, ts, 4*HLp) f32

    h = h_ref[...]
    c = c_ref[...]
    # fully unrolled serial recurrence over the chunk (static indices, so the
    # LLO scheduler can overlap the recurrent MXU push with EUP gate math)
    for i in range(ts):
        gates = gx[:, i, :] + jnp.dot(h.astype(jnp.bfloat16), whh,
                                      preferred_element_type=jnp.float32)
        ig = jax.nn.sigmoid(gates[:, 0 * HLp:1 * HLp])
        fg = jax.nn.sigmoid(gates[:, 1 * HLp:2 * HLp])
        gg = jnp.tanh(gates[:, 2 * HLp:3 * HLp])
        og = jax.nn.sigmoid(gates[:, 3 * HLp:4 * HLp])
        c = fg * c + ig * gg
        h = og * jnp.tanh(c)
    h_ref[...] = h
    c_ref[...] = c

    @pl.when(t == pl.num_programs(0) - 1)
    def _():
        out_ref[...] = (jnp.dot(h.astype(jnp.bfloat16), wcls_ref[...],
                                preferred_element_type=jnp.float32)
                        + bcls_ref[...])


# ---------------------------------------------------------------------------
# Wrapper: two pipelined pallas_calls
# ---------------------------------------------------------------------------
def run_head(hidden_states, params):
    """hidden_states: (B, S, H) float32 -> logits (B, NUM_CLASSES) float32."""
    B, S, H = hidden_states.shape
    Cp = params['bc'].shape[1]
    G = params['blstm'].shape[1]          # 4 * HLp
    HLp = G // 4
    NC = params['bcls'].shape[1]

    # Stage 1: conv + input projection, parallel over batch (megacore-friendly)
    gates_x = pl.pallas_call(
        conv_gates_kernel,
        out_shape=jax.ShapeDtypeStruct((B, S, G), jnp.float32),
        grid_spec=pltpu.PrefetchScalarGridSpec(
            num_scalar_prefetch=0,
            grid=(B,),
            in_specs=[
                pl.BlockSpec((1, S, H), lambda b: (b, 0, 0)),
                pl.BlockSpec((H, 3 * Cp), lambda b: (0, 0)),
                pl.BlockSpec((1, Cp), lambda b: (0, 0)),
                pl.BlockSpec((Cp, G), lambda b: (0, 0)),
                pl.BlockSpec((1, G), lambda b: (0, 0)),
            ],
            out_specs=pl.BlockSpec((1, S, G), lambda b: (b, 0, 0)),
        ),
        compiler_params=pltpu.CompilerParams(
            dimension_semantics=("parallel",)),
    )(hidden_states, params['wc'], params['bc'],
      params['wih'], params['blstm'])

    # Stage 2: serial recurrence, streamed in seq chunks via BlockSpec pipelining
    ts = 8 if (S % 8 == 0) else S
    nt = S // ts
    logits = pl.pallas_call(
        lstm_head_kernel,
        out_shape=jax.ShapeDtypeStruct((B, NC), jnp.float32),
        grid_spec=pltpu.PrefetchScalarGridSpec(
            num_scalar_prefetch=0,
            grid=(nt,),
            in_specs=[
                pl.BlockSpec((B, ts, G), lambda t: (0, t, 0)),
                pl.BlockSpec((HLp, G), lambda t: (0, 0)),
                pl.BlockSpec((HLp, NC), lambda t: (0, 0)),
                pl.BlockSpec((1, NC), lambda t: (0, 0)),
            ],
            out_specs=pl.BlockSpec((B, NC), lambda t: (0, 0)),
            scratch_shapes=[pltpu.VMEM((B, HLp), jnp.float32),
                            pltpu.VMEM((B, HLp), jnp.float32)],
        ),
        compiler_params=pltpu.CompilerParams(
            dimension_semantics=("arbitrary",)),
    )(gates_x, params['whh'], params['wcls'], params['bcls'])
    return logits


# ---------------------------------------------------------------------------
# Parameter construction (deterministic, xavier_uniform like init_weights),
# packed / zero-padded to lane-aligned shapes and cast to bf16 for the MXU.
# ---------------------------------------------------------------------------
def xavier_uniform(key, shape, fan_in, fan_out):
    bound = (6.0 / (fan_in + fan_out)) ** 0.5
    return jax.random.uniform(key, shape, jnp.float32, -bound, bound)


def _pack_gate_cols(w, HL, HLp):
    """w: (4*HL, in) torch layout -> (in, 4*HLp), each gate zero-padded to HLp."""
    blocks = []
    for g in range(4):
        blk = jnp.transpose(w[g * HL:(g + 1) * HL, :])      # (in, HL)
        blocks.append(_pad_axis(blk, 1, HLp))
    return jnp.concatenate(blocks, axis=1)


def _pack_gate_bias(b, HL, HLp):
    segs = [_pad_axis(b[g * HL:(g + 1) * HL], 0, HLp) for g in range(4)]
    return jnp.concatenate(segs)[None, :]                    # (1, 4*HLp)


def make_params(key, vocab, H, C, HL):
    Cp = _round_up(C, 128)
    HLp = _round_up(HL, 128)
    keys = jax.random.split(key, 10)

    # synthetic BERT embedding table (stand-in for the frozen pretrained encoder)
    embed = jax.random.normal(keys[0], (vocab, H), jnp.float32) * 0.02

    # Conv1d(H -> C, kernel=3, padding=1): torch weight (C, H, 3), xavier_uniform
    w_conv = xavier_uniform(keys[1], (C, H, 3), fan_in=H * 3, fan_out=C * 3)
    taps = [_pad_axis(jnp.transpose(w_conv[:, :, k]), 1, Cp) for k in range(3)]
    wc = jnp.concatenate(taps, axis=1).astype(jnp.bfloat16)   # (H, 3*Cp)
    bcb = 1.0 / (H * 3) ** 0.5
    b_conv = jax.random.uniform(keys[2], (C,), jnp.float32, -bcb, bcb)
    bc = _pad_axis(b_conv, 0, Cp)[None, :]                    # (1, Cp) f32

    # LSTM(C -> HL): W_ih (4HL, C), W_hh (4HL, HL); gate order i, f, g, o
    w_ih = xavier_uniform(keys[3], (4 * HL, C), fan_in=C, fan_out=4 * HL)
    w_hh = xavier_uniform(keys[4], (4 * HL, HL), fan_in=HL, fan_out=4 * HL)
    bnd = 1.0 / HL ** 0.5
    b_ih = jax.random.uniform(keys[5], (4 * HL,), jnp.float32, -bnd, bnd)
    b_hh = jax.random.uniform(keys[6], (4 * HL,), jnp.float32, -bnd, bnd)
    wih = _pad_axis(_pack_gate_cols(w_ih, HL, HLp), 0, Cp).astype(jnp.bfloat16)
    whh = _pad_axis(_pack_gate_cols(w_hh, HL, HLp), 0, HLp).astype(jnp.bfloat16)
    blstm = _pack_gate_bias(b_ih + b_hh, HL, HLp)             # (1, 4*HLp) f32

    # Linear(HL -> NUM_CLASSES)
    w_cls = xavier_uniform(keys[7], (NUM_CLASSES, HL), fan_in=HL,
                           fan_out=NUM_CLASSES)
    b_cls = jax.random.uniform(keys[8], (NUM_CLASSES,), jnp.float32,
                               -bnd, bnd)
    wcls = _pad_axis(jnp.transpose(w_cls), 0, HLp).astype(jnp.bfloat16)  # (HLp, NC)
    bcls = b_cls[None, :]                                     # (1, NC) f32

    return {
        'embed': embed,
        'wc': wc, 'bc': bc,
        'wih': wih, 'whh': whh, 'blstm': blstm,
        'wcls': wcls, 'bcls': bcls,
    }


def bert_cnn_lstm_forward(input_ids, attention_mask, params):
    # TODO(synk): the pretrained HuggingFace BERT encoder is replaced by a
    # deterministic synthetic embedding lookup (masked by attention_mask);
    # a full pretrained transformer cannot be reproduced in-script.
    hs = params['embed'][input_ids]                           # (B, S, H)
    hs = hs * attention_mask[..., None].astype(jnp.float32)
    return run_head(hs, params)


if __name__ == "__main__":
    B, S, H, VOCAB = 2, 16, 32, 64
    C, HL = 100, 256        # module defaults: cnn_out_channels=100, lstm_hidden_size=256

    key = jax.random.PRNGKey(0)
    k_ids, k_params = jax.random.split(key)
    input_ids = jax.random.randint(k_ids, (B, S), 0, VOCAB, dtype=jnp.int32)
    attention_mask = jnp.ones((B, S), dtype=jnp.int32)

    params = make_params(k_params, VOCAB, H, C, HL)

    logits = bert_cnn_lstm_forward(input_ids, attention_mask, params)
    logits = jax.block_until_ready(logits)
    assert logits.shape == (B, NUM_CLASSES) and logits.dtype == jnp.float32
    print("KERNEL_OK")
</pallas_src>

<mosaic_0001>
module attributes {stable_mosaic.version = 11 : i64} {
  func.func @conv_gates_kernel(%arg0: i32, %arg1: memref<1x16x32xf32, #tpu.memory_space<vmem>>, %arg2: memref<32x384xbf16, #tpu.memory_space<vmem>>, %arg3: memref<1x128xf32, #tpu.memory_space<vmem>>, %arg4: memref<128x1024xbf16, #tpu.memory_space<vmem>>, %arg5: memref<1x1024xf32, #tpu.memory_space<vmem>>, %arg6: memref<1x16x1024xf32, #tpu.memory_space<vmem>>) attributes {dimension_semantics = [#tpu.dimension_semantics<parallel>], iteration_bounds = array<i64: 2>, scalar_prefetch = 0 : i64, scratch_operands = 0 : i64, tpu.core_type = #tpu.core_type<tc>, window_params = [{transform_indices = @transform_0, window_bounds = array<i64: 1, 16, 32>}, {pipeline_mode = #tpu.pipeline_mode<synchronous>, transform_indices = @transform_1, window_bounds = array<i64: 32, 384>}, {pipeline_mode = #tpu.pipeline_mode<synchronous>, transform_indices = @transform_2, window_bounds = array<i64: 1, 128>}, {pipeline_mode = #tpu.pipeline_mode<synchronous>, transform_indices = @transform_3, window_bounds = array<i64: 128, 1024>}, {pipeline_mode = #tpu.pipeline_mode<synchronous>, transform_indices = @transform_4, window_bounds = array<i64: 1, 1024>}, {transform_indices = @transform_5, window_bounds = array<i64: 1, 16, 1024>}]} {
    %c0 = arith.constant 0 : index
    %c0_0 = arith.constant 0 : index
    %c0_1 = arith.constant 0 : index
    %0 = vector.load %arg1[%c0, %c0_0, %c0_1] : memref<1x16x32xf32, #tpu.memory_space<vmem>>, vector<1x16x32xf32>
    %1 = vector.shape_cast %0 : vector<1x16x32xf32> to vector<16x32xf32>
    %2 = arith.truncf %1 : vector<16x32xf32> to vector<16x32xbf16>
    %c0_2 = arith.constant 0 : index
    %c0_3 = arith.constant 0 : index
    %3 = vector.load %arg2[%c0_2, %c0_3] : memref<32x384xbf16, #tpu.memory_space<vmem>>, vector<32x384xbf16>
    %cst = arith.constant dense<0.000000e+00> : vector<16x384xf32>
    %4 = tpu.matmul %2, %3, %cst {dimension_numbers = #tpu.dot_dimension_numbers<[1], [0], [0], [1], [0, 0, 1, 1], [], []>} : vector<16x32xbf16>, vector<32x384xbf16>, vector<16x384xf32> -> vector<16x384xf32>
    %5 = vector.extract_strided_slice %4 {offsets = [0, 0], sizes = [16, 128], strides = [1, 1]} : vector<16x384xf32> to vector<16x128xf32>
    %6 = vector.extract_strided_slice %4 {offsets = [0, 128], sizes = [16, 128], strides = [1, 1]} : vector<16x384xf32> to vector<16x128xf32>
    %7 = vector.extract_strided_slice %4 {offsets = [0, 256], sizes = [16, 128], strides = [1, 1]} : vector<16x384xf32> to vector<16x128xf32>
    %cst_4 = arith.constant 0.000000e+00 : f32
    %8 = vector.broadcast %cst_4 : f32 to vector<1x128xf32>
    %9 = vector.extract_strided_slice %5 {offsets = [0, 0], sizes = [15, 128], strides = [1, 1]} : vector<16x128xf32> to vector<15x128xf32>
    %10 = tpu.concatenate %8, %9 in 0 : vector<1x128xf32>, vector<15x128xf32> -> vector<16x128xf32>
    %11 = vector.extract_strided_slice %7 {offsets = [1, 0], sizes = [15, 128], strides = [1, 1]} : vector<16x128xf32> to vector<15x128xf32>
    %12 = tpu.concatenate %11, %8 in 0 : vector<15x128xf32>, vector<1x128xf32> -> vector<16x128xf32>
    %13 = arith.addf %6, %10 : vector<16x128xf32>
    %14 = arith.addf %13, %12 : vector<16x128xf32>
    %c0_5 = arith.constant 0 : index
    %c0_6 = arith.constant 0 : index
    %15 = vector.load %arg3[%c0_5, %c0_6] : memref<1x128xf32, #tpu.memory_space<vmem>>, vector<1x128xf32>
    %16 = vector.broadcast %15 : vector<1x128xf32> to vector<16x128xf32>
    %17 = arith.addf %14, %16 : vector<16x128xf32>
    %18 = arith.truncf %17 : vector<16x128xf32> to vector<16x128xbf16>
    %c0_7 = arith.constant 0 : index
    %c0_8 = arith.constant 0 : index
    %19 = vector.load %arg4[%c0_7, %c0_8] : memref<128x1024xbf16, #tpu.memory_space<vmem>>, vector<128x1024xbf16>
    %cst_9 = arith.constant dense<0.000000e+00> : vector<16x1024xf32>
    %20 = tpu.matmul %18, %19, %cst_9 {dimension_numbers = #tpu.dot_dimension_numbers<[1], [0], [0], [1], [0, 0, 1, 1], [], []>} : vector<16x128xbf16>, vector<128x1024xbf16>, vector<16x1024xf32> -> vector<16x1024xf32>
    %c0_10 = arith.constant 0 : index
    %c0_11 = arith.constant 0 : index
    %21 = vector.load %arg5[%c0_10, %c0_11] : memref<1x1024xf32, #tpu.memory_space<vmem>>, vector<1x1024xf32>
    %22 = vector.broadcast %21 : vector<1x1024xf32> to vector<16x1024xf32>
    %23 = arith.addf %20, %22 : vector<16x1024xf32>
    %c0_12 = arith.constant 0 : index
    %c0_13 = arith.constant 0 : index
    %c0_14 = arith.constant 0 : index
    %24 = vector.load %arg6[%c0_12, %c0_13, %c0_14] : memref<1x16x1024xf32, #tpu.memory_space<vmem>>, vector<1x16x1024xf32>
    %25 = vector.shape_cast %24 : vector<1x16x1024xf32> to vector<16x1024xf32>
    %26 = vector.shape_cast %23 : vector<16x1024xf32> to vector<1x16x1024xf32>
    tpu.vector_store %arg6[%c0_12, %c0_13, %c0_14], %26 {strides = array<i32>} : memref<1x16x1024xf32, #tpu.memory_space<vmem>>, vector<1x16x1024xf32>,
    return
  }
  func.func @transform_0(%arg0: i32) -> (i32, i32, i32) {
    %c0_i32 = arith.constant 0 : i32
    %c0_i32_0 = arith.constant 0 : i32
    %c0_i32_1 = arith.constant 0 : i32
    return %arg0, %c0_i32, %c0_i32_0 : i32, i32, i32
  }
  func.func @transform_1(%arg0: i32) -> (i32, i32) {
    %c0_i32 = arith.constant 0 : i32
    %c0_i32_0 = arith.constant 0 : i32
    %c0_i32_1 = arith.constant 0 : i32
    return %c0_i32, %c0_i32_0 : i32, i32
  }
  func.func @transform_2(%arg0: i32) -> (i32, i32) {
    %c0_i32 = arith.constant 0 : i32
    %c0_i32_0 = arith.constant 0 : i32
    %c0_i32_1 = arith.constant 0 : i32
    return %c0_i32, %c0_i32_0 : i32, i32
  }
  func.func @transform_3(%arg0: i32) -> (i32, i32) {
    %c0_i32 = arith.constant 0 : i32
    %c0_i32_0 = arith.constant 0 : i32
    %c0_i32_1 = arith.constant 0 : i32
    return %c0_i32, %c0_i32_0 : i32, i32
  }
  func.func @transform_4(%arg0: i32) -> (i32, i32) {
    %c0_i32 = arith.constant 0 : i32
    %c0_i32_0 = arith.constant 0 : i32
    %c0_i32_1 = arith.constant 0 : i32
    return %c0_i32, %c0_i32_0 : i32, i32
  }
  func.func @transform_5(%arg0: i32) -> (i32, i32, i32) {
    %c0_i32 = arith.constant 0 : i32
    %c0_i32_0 = arith.constant 0 : i32
    %c0_i32_1 = arith.constant 0 : i32
    return %arg0, %c0_i32, %c0_i32_0 : i32, i32, i32
  }
}

</mosaic_0001>

<llo_original>
// kernel: tpu_custom_call.1
$region0: #{tpu_custom_call.1}
  #allocation0 [shape = 'u32[]', space=smem, size = 0x4, offset = 0x4, fixed_abs, tag = 'smem constant byte address 0x4 - core index']
  #allocation1 [shape = 'u32[144,128]{1,0:T(1,128)}', space=vmem, size = 0x12000, scoped, tag = 'internal scratch']
  %s0 = inlined_call_operand.hbm [shape: f32[2,16,32], index: 0, kind: input, shape index: {}]
  %s1 = inlined_call_operand.hbm [shape: bf16[32,384], index: 1, kind: input, shape index: {}]
  %s2 = inlined_call_operand.vmem [shape: f32[1,128], index: 2, kind: input, shape index: {}]
  %s3 = inlined_call_operand.hbm [shape: bf16[128,1024], index: 3, kind: input, shape index: {}]
  %s4 = inlined_call_operand.vmem [shape: f32[1,1024], index: 4, kind: input, shape index: {}]
  %s5 = inlined_call_operand.hbm [shape: f32[2,16,1024], index: 5, kind: output, shape index: {}]
  %s6 = sld [smem:[#allocation0]]
  $region65: #{tpu_custom_call.1} parent=0
    _
  %s8 = ssub.s32 1, %s6
  %s9 = scalar_select 0, %s8, %s6
  $region1: #{tpu_custom_call.1} parent=0
    #allocation2 [shape = 'u8[16384]{0}', space=vmem, size = 0x4000, scoped, tag = 'input window, operand 0']
    #allocation3 [shape = 's32[2]{0}', space=sflag, size = 0x8, scoped, tag = 'scoped memory for tpu_custom_call.1']
    #allocation4 [shape = 's32[2]{0}', space=sflag, size = 0x8, scoped, tag = 'scoped memory for tpu_custom_call.1']
    #allocation5 [shape = 'u8[24576]{0}', space=vmem, size = 0x6000, scoped, tag = 'input window, operand 1, single buffered']
    #allocation6 [shape = 's32[1]{0}', space=sflag, size = 0x4, scoped, tag = 'scoped memory for tpu_custom_call.1']
    #allocation7 [shape = 'u8[262144]{0}', space=vmem, size = 0x40000, scoped, tag = 'input window, operand 3, single buffered']
    #allocation8 [shape = 'u8[131072]{0}', space=vmem, size = 0x20000, scoped, tag = 'output window, operand 0']
    %10 = vsyncpa [#allocation3], 0
    %s11 = scalar_lea.sflag [#allocation3], 1
    %12 = vsyncpa %s11, 0
    %13 = vsyncpa [#allocation6], 0
    %14 = vsyncpa [#allocation4], 0
    %s15 = scalar_lea.sflag [#allocation4], 1
    %16 = vsyncpa %s15, 0
    loop: start=0, step=1, limit=4
    $region2: #{tpu_custom_call.1} parent=1 // loop_pre_header
      _
    $region3: #{tpu_custom_call.1} parent=1 // loop_header
      %s18 = sphi 0, %s22
      %p19 = scmp.ge.s32.totalorder %s18, 4
      %s28 = sphi 0, %s30
      %s31 = sphi 0, %s28
      %s32 = sphi 0, %s31
      %s48 = sphi 0, %s32
      %s52 = sphi 0, %s52
      %s54 = sphi 0, %s52
      %s55 = sphi 0, %s54
      %s69 = sphi 0, %s55
      %s73 = sphi 0, %s73
      %s75 = sphi 0, %s73
      %s76 = sphi 0, %s75
      %s90 = sphi 0, %s76
      %s94 = sphi 0, %s94
      %s96 = sphi 0, %s94
      %s97 = sphi 0, %s96
      %s111 = sphi 0, %s97
      %s115 = sphi 0, %s115
      %s117 = sphi 0, %s115
      %s118 = sphi 0, %s117
      %s132 = sphi 0, %s118
      %s138 = sphi 0, %s140
      %s141 = sphi 0, %s138
      %s142 = sphi 0, %s141
      %s158 = sphi 0, %s142
    $region4: #{tpu_custom_call.1} parent=1 // loop_header_branch
      %21 = sbr.rel (%p19) target = $region8
    $region5: #{tpu_custom_call.1} parent=1 // loop_body
      %s23 = ssub.s32 %s18, 1
      %s24 = ssub.s32 %s18, 2
      %s25 = sadd.s32 %s18, 1
      %s26 = ssub.s32 %s18, %s25
      %p27 = scmp.eq.s32.totalorder %s26, 0
      %s29 = sadd.s32 %s28, 1
      %s30 = scalar_select %p27, %s28, %s29
      %p33 = pneg %p27
      %p34 = scmp.eq.s32.totalorder %s18, 1
      %p35 = por %p33, %p34
      %p36 = scmp.ne.s32.totalorder %s28, %s31
      %p37 = scmp.eq.s32.totalorder %s18, 0
      %p38 = por %p36, %p37
      %p39 = scmp.ne.s32.totalorder %s28, %s31
      %p40 = scmp.eq.s32.totalorder %s23, 1
      %p41 = por %p39, %p40
      %p42 = scmp.ne.s32.totalorder %s31, %s32
      %p43 = scmp.eq.s32.totalorder %s23, 0
      %p44 = por %p42, %p43
      %p45 = scmp.ne.s32.totalorder %s31, %s32
      %p46 = scmp.eq.s32.totalorder %s24, 1
      %p47 = por %p45, %p46
      %p49 = scmp.ne.s32.totalorder %s32, %s48
      %p50 = scmp.eq.s32.totalorder %s24, 0
      %p51 = por %p49, %p50
      %s53 = sadd.s32 %s52, 1
      %p56 = scmp.eq.s32.totalorder %s18, 1
      %p57 = scmp.ne.s32.totalorder %s52, %s54
      %p58 = scmp.eq.s32.totalorder %s18, 0
      %p59 = por %p57, %p58
      %p60 = scmp.ne.s32.totalorder %s52, %s54
      %p61 = scmp.eq.s32.totalorder %s23, 1
      %p62 = por %p60, %p61
      %p63 = scmp.ne.s32.totalorder %s54, %s55
      %p64 = scmp.eq.s32.totalorder %s23, 0
      %p65 = por %p63, %p64
      %p66 = scmp.ne.s32.totalorder %s54, %s55
      %p67 = scmp.eq.s32.totalorder %s24, 1
      %p68 = por %p66, %p67
      %p70 = scmp.ne.s32.totalorder %s55, %s69
      %p71 = scmp.eq.s32.totalorder %s24, 0
      %p72 = por %p70, %p71
      %s74 = sadd.s32 %s73, 1
      %p77 = scmp.eq.s32.totalorder %s18, 1
      %p78 = scmp.ne.s32.totalorder %s73, %s75
      %p79 = scmp.eq.s32.totalorder %s18, 0
      %p80 = por %p78, %p79
      %p81 = scmp.ne.s32.totalorder %s73, %s75
      %p82 = scmp.eq.s32.totalorder %s23, 1
      %p83 = por %p81, %p82
      %p84 = scmp.ne.s32.totalorder %s75, %s76
      %p85 = scmp.eq.s32.totalorder %s23, 0
      %p86 = por %p84, %p85
      %p87 = scmp.ne.s32.totalorder %s75, %s76
      %p88 = scmp.eq.s32.totalorder %s24, 1
      %p89 = por %p87, %p88
      %p91 = scmp.ne.s32.totalorder %s76, %s90
      %p92 = scmp.eq.s32.totalorder %s24, 0
      %p93 = por %p91, %p92
      %s95 = sadd.s32 %s94, 1
      %p98 = scmp.eq.s32.totalorder %s18, 1
      %p99 = scmp.ne.s32.totalorder %s94, %s96
      %p100 = scmp.eq.s32.totalorder %s18, 0
      %p101 = por %p99, %p100
      %p102 = scmp.ne.s32.totalorder %s94, %s96
      %p103 = scmp.eq.s32.totalorder %s23, 1
      %p104 = por %p102, %p103
      %p105 = scmp.ne.s32.totalorder %s96, %s97
      %p106 = scmp.eq.s32.totalorder %s23, 0
      %p107 = por %p105, %p106
      %p108 = scmp.ne.s32.totalorder %s96, %s97
      %p109 = scmp.eq.s32.totalorder %s24, 1
      %p110 = por %p108, %p109
      %p112 = scmp.ne.s32.totalorder %s97, %s111
      %p113 = scmp.eq.s32.totalorder %s24, 0
      %p114 = por %p112, %p113
      %s116 = sadd.s32 %s115, 1
      %p119 = scmp.eq.s32.totalorder %s18, 1
      %p120 = scmp.ne.s32.totalorder %s115, %s117
      %p121 = scmp.eq.s32.totalorder %s18, 0
      %p122 = por %p120, %p121
      %p123 = scmp.ne.s32.totalorder %s115, %s117
      %p124 = scmp.eq.s32.totalorder %s23, 1
      %p125 = por %p123, %p124
      %p126 = scmp.ne.s32.totalorder %s117, %s118
      %p127 = scmp.eq.s32.totalorder %s23, 0
      %p128 = por %p126, %p127
      %p129 = scmp.ne.s32.totalorder %s117, %s118
      %p130 = scmp.eq.s32.totalorder %s24, 1
      %p131 = por %p129, %p130
      %p133 = scmp.ne.s32.totalorder %s118, %s132
      %p134 = scmp.eq.s32.totalorder %s24, 0
      %p135 = por %p133, %p134
      %s136 = ssub.s32 %s18, %s25
      %p137 = scmp.eq.s32.totalorder %s136, 0
      %s139 = sadd.s32 %s138, 1
      %s140 = scalar_select %p137, %s138, %s139
      %p143 = pneg %p137
      %p144 = scmp.eq.s32.totalorder %s18, 1
      %p145 = por %p143, %p144
      %p146 = scmp.ne.s32.totalorder %s138, %s141
      %p147 = scmp.eq.s32.totalorder %s18, 0
      %p148 = por %p146, %p147
      %p149 = scmp.ne.s32.totalorder %s138, %s141
      %p150 = scmp.eq.s32.totalorder %s23, 1
      %p151 = por %p149, %p150
      %p152 = scmp.ne.s32.totalorder %s141, %s142
      %p153 = scmp.eq.s32.totalorder %s23, 0
      %p154 = por %p152, %p153
      %p155 = scmp.ne.s32.totalorder %s141, %s142
      %p156 = scmp.eq.s32.totalorder %s24, 1
      %p157 = por %p155, %p156
      %p159 = scmp.ne.s32.totalorder %s142, %s158
      %p160 = scmp.eq.s32.totalorder %s24, 0
      %p161 = por %p159, %p160
      %p162 = scmp.le.s32.totalorder 1, %s18
      %p163 = scmp.lt.s32.totalorder %s18, 3
      %p164 = pnand %p162, %p163
      %p165 = pneg %p164
      // Predicated region
      $region9: #{tpu_custom_call.1} parent=5 // pred_check
        _
      $region10: #{tpu_custom_call.1} parent=5 // pred_check_branch
        %167 = sbr.rel (%p164) target = $region12
      $region11: #{tpu_custom_call.1} parent=5 // pred_region
        %s168 = ssub.s32 %s18, 1
        // Predicated region
        $region13: #{tpu_custom_call.1} parent=11 // pred_check
          %p169 = pneg %p65
        $region14: #{tpu_custom_call.1} parent=11 // pred_check_branch
          %171 = sbr.rel (%p169) target = $region16
        $region15: #{tpu_custom_call.1} parent=11 // pred_region
          %s173 = ssub.s32 768, 768
          %174 = vsyncadd [#allocation6], %s173
          %s175 = sshll.u32 [#allocation5], 4
          %s176 = int_to_ptr.vmem [resolvable:$true] %s175
          %181 = dma.hbm_to_vmem [thread:$0]  %s1, 768, %s176, [#allocation6], 192, 192, 12
        $region16: #{tpu_custom_call.1} parent=11 // pred_fallthru
          _
        // Predicated region
        $region17: #{tpu_custom_call.1} parent=11 // pred_check
          %p182 = pneg %p86
        $region18: #{tpu_custom_call.1} parent=11 // pred_check_branch
          %184 = sbr.rel (%p182) target = $region20
        $region19: #{tpu_custom_call.1} parent=11 // pred_region
          _
        $region20: #{tpu_custom_call.1} parent=11 // pred_fallthru
          _
        // Predicated region
        $region21: #{tpu_custom_call.1} parent=11 // pred_check
          %p185 = pneg %p107
        $region22: #{tpu_custom_call.1} parent=11 // pred_check_branch
          %187 = sbr.rel (%p185) target = $region24
        $region23: #{tpu_custom_call.1} parent=11 // pred_region
          %s189 = ssub.s32 8192, 8192
          %190 = vsyncadd [#allocation6], %s189
          %s191 = sshll.u32 [#allocation7], 4
          %s192 = int_to_ptr.vmem [resolvable:$true] %s191
          %197 = dma.hbm_to_vmem [thread:$0]  %s3, 8192, %s192, [#allocation6], 512, 512, 32
        $region24: #{tpu_custom_call.1} parent=11 // pred_fallthru
          _
        // Predicated region
        $region25: #{tpu_custom_call.1} parent=11 // pred_check
          %p198 = pneg %p128
        $region26: #{tpu_custom_call.1} parent=11 // pred_check_branch
          %200 = sbr.rel (%p198) target = $region28
        $region27: #{tpu_custom_call.1} parent=11 // pred_region
          _
        $region28: #{tpu_custom_call.1} parent=11 // pred_fallthru
          _
      $region12: #{tpu_custom_call.1} parent=5 // pred_fallthru
        _
      %p201 = scmp.lt.s32.totalorder %s18, 2
      // Predicated region
      $region29: #{tpu_custom_call.1} parent=5 // pred_check
        %p202 = pneg %p201
      $region30: #{tpu_custom_call.1} parent=5 // pred_check_branch
        %204 = sbr.rel (%p202) target = $region32
      $region31: #{tpu_custom_call.1} parent=5 // pred_region
        // Predicated region
        $region33: #{tpu_custom_call.1} parent=31 // pred_check
          %p205 = pneg %p38
        $region34: #{tpu_custom_call.1} parent=31 // pred_check_branch
          %207 = sbr.rel (%p205) target = $region36
        $region35: #{tpu_custom_call.1} parent=31 // pred_region
          %s208 = sand.u32 %s28, 1
          %s209 = scalar_lea.sflag [#allocation3], %s208
          %s210 = sand.u32 %s28, 1
          %s211 = smul.addr %s210, 16
          %s212 = scalar_lea.vmem [#allocation2], %s211
          %s214 = ssub.s32 256, 256
          %215 = vsyncadd %s209, %s214
          %s216 = smul.addr %s18, 2
          %s217 = smul.addr %s216, 128
          %s218 = scalar_lea.hbm %s0, %s217
          %s219 = sshll.u32 %s212, 4
          %s220 = int_to_ptr.vmem [resolvable:$true] %s219
          %225 = dma.hbm_to_vmem [thread:$0]  %s218, 256, %s220, %s209, 128, 128, 8
        $region36: #{tpu_custom_call.1} parent=31 // pred_fallthru
          _
      $region32: #{tpu_custom_call.1} parent=5 // pred_fallthru
        _
      %p226 = scmp.le.s32.totalorder 1, %s18
      %p227 = scmp.lt.s32.totalorder %s18, 3
      %p228 = pnand %p226, %p227
      %p229 = pneg %p228
      // Predicated region
      $region37: #{tpu_custom_call.1} parent=5 // pred_check
        _
      $region38: #{tpu_custom_call.1} parent=5 // pred_check_branch
        %231 = sbr.rel (%p228) target = $region40
      $region39: #{tpu_custom_call.1} parent=5 // pred_region
        %s232 = ssub.s32 %s18, 1
        %s233 = sand.u32 %s31, 1
        %s234 = scalar_lea.sflag [#allocation3], %s233
        %s235 = sand.u32 %s31, 1
        %s236 = smul.addr %s235, 16
        %s237 = scalar_lea.vmem [#allocation2], %s236
        // Predicated region
        $region41: #{tpu_custom_call.1} parent=39 // pred_check
          %p238 = pneg %p44
        $region42: #{tpu_custom_call.1} parent=39 // pred_check_branch
          %240 = sbr.rel (%p238) target = $region44
        $region43: #{tpu_custom_call.1} parent=39 // pred_region
          %241 = dma.done %s234, 256
        $region44: #{tpu_custom_call.1} parent=39 // pred_fallthru
          _
        // Predicated region
        $region45: #{tpu_custom_call.1} parent=39 // pred_check
          %p242 = pneg %p65
        $region46: #{tpu_custom_call.1} parent=39 // pred_check_branch
          %244 = sbr.rel (%p242) target = $region48
        $region47: #{tpu_custom_call.1} parent=39 // pred_region
          %245 = dma.done [#allocation6], 768
        $region48: #{tpu_custom_call.1} parent=39 // pred_fallthru
          _
        // Predicated region
        $region49: #{tpu_custom_call.1} parent=39 // pred_check
          %p246 = pneg %p107
        $region50: #{tpu_custom_call.1} parent=39 // pred_check_branch
          %248 = sbr.rel (%p246) target = $region52
        $region51: #{tpu_custom_call.1} parent=39 // pred_region
          %249 = dma.done [#allocation6], 8192
        $region52: #{tpu_custom_call.1} parent=39 // pred_fallthru
          _
        %s250 = sand.u32 %s31, 1
        %s251 = scalar_lea.sflag [#allocation3], %s250
        %s252 = sand.u32 %s31, 1
        %s253 = smul.addr %s252, 16
        %s254 = scalar_lea.vmem [#allocation2], %s253
        %p255 = pneg %p44
        %p256 = pneg %p41
        %p257 = pneg %p65
        %p258 = pneg %p62
        %p259 = pneg %p86
        %p260 = pneg %p83
        %p261 = pneg %p107
        %p262 = pneg %p104
        %p263 = pneg %p128
        %p264 = pneg %p125
        %p265 = pneg %p154
        %p266 = pneg %p151
        %s267 = sand.u32 %s141, 1
        %s268 = scalar_lea.sflag [#allocation4], %s267
        %s269 = sand.u32 %s141, 1
        %s270 = smul.addr %s269, 128
        %s271 = scalar_lea.vmem [#allocation8], %s270
        %v273 = vld [vmem:[%s237] sm:$0xff]
        %v274 = vld [vmem:[%s237 + $0x8] sm:$0xff]
        %v275 = vpack.c.bf16 %v274, %v273
        %v276 = vld [vmem:[#allocation5] sm:$0xff]
        %v277 = vld [vmem:[#allocation5 + $0x8] sm:$0xf]
        %v278 = vld [vmem:[#allocation5 + $0xc] sm:$0xff]
        %v279 = vld [vmem:[#allocation5 + $0x14] sm:$0xf]
        %v280 = vld [vmem:[#allocation5 + $0x18] sm:$0xff]
        %v281 = vld [vmem:[#allocation5 + $0x20] sm:$0xf]
        %v282 = vld [vmem:[#allocation5 + $0x24] sm:$0xff]
        %v283 = vld [vmem:[#allocation5 + $0x2c] sm:$0xf]
        %v292 = vunpack.c.l.b16 %v276
        %v293 = vunpack.c.h.b16 %v276
        %v294 = vunpack.c.l.b16 %v277
        %v295 = vunpack.c.l.b16 %v278
        %v296 = vunpack.c.h.b16 %v278
        %v297 = vunpack.c.l.b16 %v279
        %v298 = vunpack.c.l.b16 %v280
        %v299 = vunpack.c.h.b16 %v280
        %v300 = vunpack.c.l.b16 %v281
        %v301 = vunpack.c.l.b16 %v282
        %v302 = vunpack.c.h.b16 %v282
        %v303 = vunpack.c.l.b16 %v283
        %v304 = vpack.c.b16 %v295, %v292
        %v305 = vpack.c.b16 %v296, %v293
        %v306 = vpack.c.b16 %v297, %v294
        %v307 = vpack.c.b16 %v301, %v298
        %v308 = vpack.c.b16 %v302, %v299
        %v309 = vpack.c.b16 %v303, %v300
        %vm316 = vcmask 261120
        %v318 = vsel %vm316, %v275, 0
        %320 = vmatprep.subr.bf16.mxu0 %v305
        %321 = vmatpush1.bf16.msra.mxu0 %v304
        %322 = vmatprep.subr.bf16.mxu0 %v308
        %323 = vmatpush1.bf16.msra.mxu0 %v307
        %324 = vmatprep.subr.bf16.mxu0 0
        %325 = vmatpush1.bf16.msra.mxu0 0
        %326 = vmatprep.subr.bf16.mxu0 0
        %327 = vmatpush1.bf16.msra.mxu0 0
        %328 = vmatprep.subr.bf16.mxu0 0
        %329 = vmatpush1.bf16.msra.mxu0 0
        %330 = vmatprep.subr.bf16.mxu0 0
        %331 = vmatpush1.bf16.msra.mxu0 0
        %332 = vmatprep.subr.bf16.mxu0 0
        %333 = vmatpush1.bf16.msra.mxu0 0
        %334 = vmatprep.subr.bf16.mxu0 0
        %335 = vmatpush1.bf16.msra.mxu0 0
        %336 = vmatprep.subr.bf16.mxu0 0
        %337 = vmatpush1.bf16.msra.mxu0 0
        %338 = vmatprep.subr.bf16.mxu0 0
        %339 = vmatpush1.bf16.msra.mxu0 0
        %340 = vmatprep.subr.bf16.mxu0 0
        %341 = vmatpush1.bf16.msra.mxu0 0
        %342 = vmatprep.subr.bf16.mxu0 0
        %343 = vmatpush1.bf16.msra.mxu0 0
        %344 = vmatprep.subr.bf16.mxu0 0
        %345 = vmatpush1.bf16.msra.mxu0 0
        %346 = vmatprep.subr.bf16.mxu0 0
        %347 = vmatpush1.bf16.msra.mxu0 0
        %348 = vmatprep.subr.bf16.mxu0 0
        %349 = vmatpush1.bf16.msra.mxu0 0
        %350 = vmatprep.subr.bf16.mxu0 0
        %351 = vmatpush1.bf16.msra.mxu0 0
        %352 = vmatprep.mubr.bf16.mxu0 0
        %353 = vmatmul.mubr.bf16.gmra.mrb[0].mxu0 %v318
        %v354 = vpop.f32.mrb[0].mxu0
        %v355 = vadd.f32 0.0, %v354
        %v356 = vpop.f32.mrb[0].mxu0
        %v357 = vadd.f32 0.0, %v356
        %v358 = vpop.f32.mrb[0].mxu0
        %v359 = vadd.f32 0.0, %v358
        %v360 = vpop.f32.mrb[0].mxu0
        %v361 = vadd.f32 0.0, %v360
        %362 = vdwg.mxu0
        %363 = vmatprep.subr.bf16.mxu0 0
        %364 = vmatpush1.bf16.msra.mxu0 %v306
        %365 = vmatprep.subr.bf16.mxu0 0
        %366 = vmatpush1.bf16.msra.mxu0 %v309
        %367 = vmatprep.subr.bf16.mxu0 0
        %368 = vmatpush1.bf16.msra.mxu0 0
        %369 = vmatprep.subr.bf16.mxu0 0
        %370 = vmatpush1.bf16.msra.mxu0 0
        %371 = vmatprep.subr.bf16.mxu0 0
        %372 = vmatpush1.bf16.msra.mxu0 0
        %373 = vmatprep.subr.bf16.mxu0 0
        %374 = vmatpush1.bf16.msra.mxu0 0
        %375 = vmatprep.subr.bf16.mxu0 0
        %376 = vmatpush1.bf16.msra.mxu0 0
        %377 = vmatprep.subr.bf16.mxu0 0
        %378 = vmatpush1.bf16.msra.mxu0 0
        %379 = vmatprep.subr.bf16.mxu0 0
        %380 = vmatpush1.bf16.msra.mxu0 0
        %381 = vmatprep.subr.bf16.mxu0 0
        %382 = vmatpush1.bf16.msra.mxu0 0
        %383 = vmatprep.subr.bf16.mxu0 0
        %384 = vmatpush1.bf16.msra.mxu0 0
        %385 = vmatprep.subr.bf16.mxu0 0
        %386 = vmatpush1.bf16.msra.mxu0 0
        %387 = vmatprep.subr.bf16.mxu0 0
        %388 = vmatpush1.bf16.msra.mxu0 0
        %389 = vmatprep.subr.bf16.mxu0 0
        %390 = vmatpush1.bf16.msra.mxu0 0
        %391 = vmatprep.subr.bf16.mxu0 0
        %392 = vmatpush1.bf16.msra.mxu0 0
        %393 = vmatprep.subr.bf16.mxu0 0
        %394 = vmatpush1.bf16.msra.mxu0 0
        %395 = vmatprep.mubr.bf16.mxu0 0
        %396 = vmatmul.mubr.bf16.gmra.mrb[0].mxu0 %v318
        %v397 = vpop.f32.mrb[0].mxu0
        %v398 = vadd.f32 0.0, %v397
        %v399 = vpop.f32.mrb[0].mxu0
        %v400 = vpop.f32.mrb[0].mxu0
        %v401 = vadd.f32 0.0, %v400
        %v402 = vpop.f32.mrb[0].mxu0
        %403 = vdwg.mxu0
        %vm406 = vcmask 1040384
        %v407 = vrot.slane %v355, 7
        %v408 = vrot.slane %v359, 7
        %v409 = vsel %vm406, %v407, %v408
        %v412 = vsel %vm406, 0.0, %v407
        %vm415 = vcmask 1046528
        %v416 = vrot.slane %v398, 1
        %v417 = vrot.slane %v401, 1
        %v418 = vsel %vm415, %v416, %v417
        %v421 = vsel %vm415, %v417, 0.0
        %v422 = vadd.f32 %v357, %v412
        %v423 = vadd.f32 %v361, %v409
        %v424 = vadd.f32 %v422, %v418
        %v425 = vadd.f32 %v423, %v421
        %v426 = vld [vmem:[%s2] sm:$0x1]
        %v428 = vlaneseq
        %v429 = vshrl.u32 %v428, 7
        %v430 = vsub.s32 0, %v429
        %v431 = vrot.slane %v426, %v430
        %v433 = vadd.f32 %v424, %v431
        %v434 = vadd.f32 %v425, %v431
        %v435 = vpack.c.bf16 %v434, %v433
        %v436 = vld [vmem:[#allocation7] sm:$0xff]
        %v437 = vld [vmem:[#allocation7 + $0x8] sm:$0xff]
        %v438 = vld [vmem:[#allocation7 + $0x10] sm:$0xff]
        %v439 = vld [vmem:[#allocation7 + $0x18] sm:$0xff]
        %v440 = vld [vmem:[#allocation7 + $0x20] sm:$0xff]
        %v441 = vld [vmem:[#allocation7 + $0x28] sm:$0xff]
        %v442 = vld [vmem:[#allocation7 + $0x30] sm:$0xff]
        %v443 = vld [vmem:[#allocation7 + $0x38] sm:$0xff]
        %v444 = vld [vmem:[#allocation7 + $0x40] sm:$0xff]
        %v445 = vld [vmem:[#allocation7 + $0x48] sm:$0xff]
        %v446 = vld [vmem:[#allocation7 + $0x50] sm:$0xff]
        %v447 = vld [vmem:[#allocation7 + $0x58] sm:$0xff]
        %v448 = vld [vmem:[#allocation7 + $0x60] sm:$0xff]
        %v449 = vld [vmem:[#allocation7 + $0x68] sm:$0xff]
        %v450 = vld [vmem:[#allocation7 + $0x70] sm:$0xff]
        %v451 = vld [vmem:[#allocation7 + $0x78] sm:$0xff]
        %v452 = vld [vmem:[#allocation7 + $0x80] sm:$0xff]
        %v453 = vld [vmem:[#allocation7 + $0x88] sm:$0xff]
        %v454 = vld [vmem:[#allocation7 + $0x90] sm:$0xff]
        %v455 = vld [vmem:[#allocation7 + $0x98] sm:$0xff]
        %v456 = vld [vmem:[#allocation7 + $0xa0] sm:$0xff]
        %v457 = vld [vmem:[#allocation7 + $0xa8] sm:$0xff]
        %v458 = vld [vmem:[#allocation7 + $0xb0] sm:$0xff]
        %v459 = vld [vmem:[#allocation7 + $0xb8] sm:$0xff]
        %v460 = vld [vmem:[#allocation7 + $0xc0] sm:$0xff]
        %v461 = vld [vmem:[#allocation7 + $0xc8] sm:$0xff]
        %v462 = vld [vmem:[#allocation7 + $0xd0] sm:$0xff]
        %v463 = vld [vmem:[#allocation7 + $0xd8] sm:$0xff]
        %v464 = vld [vmem:[#allocation7 + $0xe0] sm:$0xff]
        %v465 = vld [vmem:[#allocation7 + $0xe8] sm:$0xff]
        %v466 = vld [vmem:[#allocation7 + $0xf0] sm:$0xff]
        %v467 = vld [vmem:[#allocation7 + $0xf8] sm:$0xff]
        %v468 = vld [vmem:[#allocation7 + $0x100] sm:$0xff]
        %v469 = vld [vmem:[#allocation7 + $0x108] sm:$0xff]
        %v470 = vld [vmem:[#allocation7 + $0x110] sm:$0xff]
        %v471 = vld [vmem:[#allocation7 + $0x118] sm:$0xff]
        %v472 = vld [vmem:[#allocation7 + $0x120] sm:$0xff]
        %v473 = vld [vmem:[#allocation7 + $0x128] sm:$0xff]
        %v474 = vld [vmem:[#allocation7 + $0x130] sm:$0xff]
        %v475 = vld [vmem:[#allocation7 + $0x138] sm:$0xff]
        %v476 = vld [vmem:[#allocation7 + $0x140] sm:$0xff]
        %v477 = vld [vmem:[#allocation7 + $0x148] sm:$0xff]
        %v478 = vld [vmem:[#allocation7 + $0x150] sm:$0xff]
        %v479 = vld [vmem:[#allocation7 + $0x158] sm:$0xff]
        %v480 = vld [vmem:[#allocation7 + $0x160] sm:$0xff]
        %v481 = vld [vmem:[#allocation7 + $0x168] sm:$0xff]
        %v482 = vld [vmem:[#allocation7 + $0x170] sm:$0xff]
        %v483 = vld [vmem:[#allocation7 + $0x178] sm:$0xff]
        %v484 = vld [vmem:[#allocation7 + $0x180] sm:$0xff]
        %v485 = vld [vmem:[#allocation7 + $0x188] sm:$0xff]
        %v486 = vld [vmem:[#allocation7 + $0x190] sm:$0xff]
        %v487 = vld [vmem:[#allocation7 + $0x198] sm:$0xff]
        %v488 = vld [vmem:[#allocation7 + $0x1a0] sm:$0xff]
        %v489 = vld [vmem:[#allocation7 + $0x1a8] sm:$0xff]
        %v490 = vld [vmem:[#allocation7 + $0x1b0] sm:$0xff]
        %v491 = vld [vmem:[#allocation7 + $0x1b8] sm:$0xff]
        %v492 = vld [vmem:[#allocation7 + $0x1c0] sm:$0xff]
        %v493 = vld [vmem:[#allocation7 + $0x1c8] sm:$0xff]
        %v494 = vld [vmem:[#allocation7 + $0x1d0] sm:$0xff]
        %v495 = vld [vmem:[#allocation7 + $0x1d8] sm:$0xff]
        %v496 = vld [vmem:[#allocation7 + $0x1e0] sm:$0xff]
        %v497 = vld [vmem:[#allocation7 + $0x1e8] sm:$0xff]
        %v498 = vld [vmem:[#allocation7 + $0x1f0] sm:$0xff]
        %v499 = vld [vmem:[#allocation7 + $0x1f8] sm:$0xff]
        %v500 = vld [vmem:[%s4] sm:$0xff]
        %v502 = vlaneseq
        %v503 = vshrl.u32 %v502, 7
        %v504 = vsub.s32 0, %v503
        %v505 = vrot.slane %v500, %v504
        %v506 = vlaneseq
        %v507 = vshrl.u32 %v506, 7
        %v508 = vsub.s32 1, %v507
        %v509 = vrot.slane %v500, %v508
        %v510 = vlaneseq
        %v511 = vshrl.u32 %v510, 7
        %v512 = vsub.s32 2, %v511
        %v513 = vrot.slane %v500, %v512
        %v514 = vlaneseq
        %v515 = vshrl.u32 %v514, 7
        %v516 = vsub.s32 3, %v515
        %v517 = vrot.slane %v500, %v516
        %v518 = vlaneseq
        %v519 = vshrl.u32 %v518, 7
        %v520 = vsub.s32 4, %v519
        %v521 = vrot.slane %v500, %v520
        %v522 = vlaneseq
        %v523 = vshrl.u32 %v522, 7
        %v524 = vsub.s32 5, %v523
        %v525 = vrot.slane %v500, %v524
        %v526 = vlaneseq
        %v527 = vshrl.u32 %v526, 7
        %v528 = vsub.s32 6, %v527
        %v529 = vrot.slane %v500, %v528
        %v530 = vlaneseq
        %v531 = vshrl.u32 %v530, 7
        %v532 = vsub.s32 7, %v531
        %v533 = vrot.slane %v500, %v532
        %v606 = vunpack.c.l.b16 %v436
        %v607 = vunpack.c.h.b16 %v436
        %v608 = vunpack.c.l.b16 %v437
        %v609 = vunpack.c.h.b16 %v437
        %v610 = vunpack.c.l.b16 %v438
        %v611 = vunpack.c.h.b16 %v438
        %v612 = vunpack.c.l.b16 %v439
        %v613 = vunpack.c.h.b16 %v439
        %v614 = vunpack.c.l.b16 %v440
        %v615 = vunpack.c.h.b16 %v440
        %v616 = vunpack.c.l.b16 %v441
        %v617 = vunpack.c.h.b16 %v441
        %v618 = vunpack.c.l.b16 %v442
        %v619 = vunpack.c.h.b16 %v442
        %v620 = vunpack.c.l.b16 %v443
        %v621 = vunpack.c.h.b16 %v443
        %v622 = vunpack.c.l.b16 %v444
        %v623 = vunpack.c.h.b16 %v444
        %v624 = vunpack.c.l.b16 %v445
        %v625 = vunpack.c.h.b16 %v445
        %v626 = vunpack.c.l.b16 %v446
        %v627 = vunpack.c.h.b16 %v446
        %v628 = vunpack.c.l.b16 %v447
        %v629 = vunpack.c.h.b16 %v447
        %v630 = vunpack.c.l.b16 %v448
        %v631 = vunpack.c.h.b16 %v448
        %v632 = vunpack.c.l.b16 %v449
        %v633 = vunpack.c.h.b16 %v449
        %v634 = vunpack.c.l.b16 %v450
        %v635 = vunpack.c.h.b16 %v450
        %v636 = vunpack.c.l.b16 %v451
        %v637 = vunpack.c.h.b16 %v451
        %v638 = vunpack.c.l.b16 %v452
        %v639 = vunpack.c.h.b16 %v452
        %v640 = vunpack.c.l.b16 %v453
        %v641 = vunpack.c.h.b16 %v453
        %v642 = vunpack.c.l.b16 %v454
        %v643 = vunpack.c.h.b16 %v454
        %v644 = vunpack.c.l.b16 %v455
        %v645 = vunpack.c.h.b16 %v455
        %v646 = vunpack.c.l.b16 %v456
        %v647 = vunpack.c.h.b16 %v456
        %v648 = vunpack.c.l.b16 %v457
        %v649 = vunpack.c.h.b16 %v457
        %v650 = vunpack.c.l.b16 %v458
        %v651 = vunpack.c.h.b16 %v458
        %v652 = vunpack.c.l.b16 %v459
        %v653 = vunpack.c.h.b16 %v459
        %v654 = vunpack.c.l.b16 %v460
        %v655 = vunpack.c.h.b16 %v460
        %v656 = vunpack.c.l.b16 %v461
        %v657 = vunpack.c.h.b16 %v461
        %v658 = vunpack.c.l.b16 %v462
        %v659 = vunpack.c.h.b16 %v462
        %v660 = vunpack.c.l.b16 %v463
        %v661 = vunpack.c.h.b16 %v463
        %v662 = vunpack.c.l.b16 %v464
        %v663 = vunpack.c.h.b16 %v464
        %v664 = vunpack.c.l.b16 %v465
        %v665 = vunpack.c.h.b16 %v465
        %v666 = vunpack.c.l.b16 %v466
        %v667 = vunpack.c.h.b16 %v466
        %v668 = vunpack.c.l.b16 %v467
        %v669 = vunpack.c.h.b16 %v467
        %v670 = vunpack.c.l.b16 %v468
        %v671 = vunpack.c.h.b16 %v468
        %v672 = vunpack.c.l.b16 %v469
        %v673 = vunpack.c.h.b16 %v469
        %v674 = vunpack.c.l.b16 %v470
        %v675 = vunpack.c.h.b16 %v470
        %v676 = vunpack.c.l.b16 %v471
        %v677 = vunpack.c.h.b16 %v471
        %v678 = vunpack.c.l.b16 %v472
        %v679 = vunpack.c.h.b16 %v472
        %v680 = vunpack.c.l.b16 %v473
        %v681 = vunpack.c.h.b16 %v473
        %v682 = vunpack.c.l.b16 %v474
        %v683 = vunpack.c.h.b16 %v474
        %v684 = vunpack.c.l.b16 %v475
        %v685 = vunpack.c.h.b16 %v475
        %v686 = vunpack.c.l.b16 %v476
        %v687 = vunpack.c.h.b16 %v476
        %v688 = vunpack.c.l.b16 %v477
        %v689 = vunpack.c.h.b16 %v477
        %v690 = vunpack.c.l.b16 %v478
        %v691 = vunpack.c.h.b16 %v478
        %v692 = vunpack.c.l.b16 %v479
        %v693 = vunpack.c.h.b16 %v479
        %v694 = vunpack.c.l.b16 %v480
        %v695 = vunpack.c.h.b16 %v480
        %v696 = vunpack.c.l.b16 %v481
        %v697 = vunpack.c.h.b16 %v481
        %v698 = vunpack.c.l.b16 %v482
        %v699 = vunpack.c.h.b16 %v482
        %v700 = vunpack.c.l.b16 %v483
        %v701 = vunpack.c.h.b16 %v483
        %v702 = vunpack.c.l.b16 %v484
        %v703 = vunpack.c.h.b16 %v484
        %v704 = vunpack.c.l.b16 %v485
        %v705 = vunpack.c.h.b16 %v485
        %v706 = vunpack.c.l.b16 %v486
        %v707 = vunpack.c.h.b16 %v486
        %v708 = vunpack.c.l.b16 %v487
        %v709 = vunpack.c.h.b16 %v487
        %v710 = vunpack.c.l.b16 %v488
        %v711 = vunpack.c.h.b16 %v488
        %v712 = vunpack.c.l.b16 %v489
        %v713 = vunpack.c.h.b16 %v489
        %v714 = vunpack.c.l.b16 %v490
        %v715 = vunpack.c.h.b16 %v490
        %v716 = vunpack.c.l.b16 %v491
        %v717 = vunpack.c.h.b16 %v491
        %v718 = vunpack.c.l.b16 %v492
        %v719 = vunpack.c.h.b16 %v492
        %v720 = vunpack.c.l.b16 %v493
        %v721 = vunpack.c.h.b16 %v493
        %v722 = vunpack.c.l.b16 %v494
        %v723 = vunpack.c.h.b16 %v494
        %v724 = vunpack.c.l.b16 %v495
        %v725 = vunpack.c.h.b16 %v495
        %v726 = vunpack.c.l.b16 %v496
        %v727 = vunpack.c.h.b16 %v496
        %v728 = vunpack.c.l.b16 %v497
        %v729 = vunpack.c.h.b16 %v497
        %v730 = vunpack.c.l.b16 %v498
        %v731 = vunpack.c.h.b16 %v498
        %v732 = vunpack.c.l.b16 %v499
        %v733 = vunpack.c.h.b16 %v499
        %v734 = vpack.c.b16 %v614, %v606
        %v735 = vpack.c.b16 %v615, %v607
        %v736 = vpack.c.b16 %v616, %v608
        %v737 = vpack.c.b16 %v617, %v609
        %v738 = vpack.c.b16 %v618, %v610
        %v739 = vpack.c.b16 %v619, %v611
        %v740 = vpack.c.b16 %v620, %v612
        %v741 = vpack.c.b16 %v621, %v613
        %v742 = vpack.c.b16 %v630, %v622
        %v743 = vpack.c.b16 %v631, %v623
        %v744 = vpack.c.b16 %v632, %v624
        %v745 = vpack.c.b16 %v633, %v625
        %v746 = vpack.c.b16 %v634, %v626
        %v747 = vpack.c.b16 %v635, %v627
        %v748 = vpack.c.b16 %v636, %v628
        %v749 = vpack.c.b16 %v637, %v629
        %v750 = vpack.c.b16 %v646, %v638
        %v751 = vpack.c.b16 %v647, %v639
        %v752 = vpack.c.b16 %v648, %v640
        %v753 = vpack.c.b16 %v649, %v641
        %v754 = vpack.c.b16 %v650, %v642
        %v755 = vpack.c.b16 %v651, %v643
        %v756 = vpack.c.b16 %v652, %v644
        %v757 = vpack.c.b16 %v653, %v645
        %v758 = vpack.c.b16 %v662, %v654
        %v759 = vpack.c.b16 %v663, %v655
        %v760 = vpack.c.b16 %v664, %v656
        %v761 = vpack.c.b16 %v665, %v657
        %v762 = vpack.c.b16 %v666, %v658
        %v763 = vpack.c.b16 %v667, %v659
        %v764 = vpack.c.b16 %v668, %v660
        %v765 = vpack.c.b16 %v669, %v661
        %v766 = vpack.c.b16 %v678, %v670
        %v767 = vpack.c.b16 %v679, %v671
        %v768 = vpack.c.b16 %v680, %v672
        %v769 = vpack.c.b16 %v681, %v673
        %v770 = vpack.c.b16 %v682, %v674
        %v771 = vpack.c.b16 %v683, %v675
        %v772 = vpack.c.b16 %v684, %v676
        %v773 = vpack.c.b16 %v685, %v677
        %v774 = vpack.c.b16 %v694, %v686
        %v775 = vpack.c.b16 %v695, %v687
        %v776 = vpack.c.b16 %v696, %v688
        %v777 = vpack.c.b16 %v697, %v689
        %v778 = vpack.c.b16 %v698, %v690
        %v779 = vpack.c.b16 %v699, %v691
        %v780 = vpack.c.b16 %v700, %v692
        %v781 = vpack.c.b16 %v701, %v693
        %v782 = vpack.c.b16 %v710, %v702
        %v783 = vpack.c.b16 %v711, %v703
        %v784 = vpack.c.b16 %v712, %v704
        %v785 = vpack.c.b16 %v713, %v705
        %v786 = vpack.c.b16 %v714, %v706
        %v787 = vpack.c.b16 %v715, %v707
        %v788 = vpack.c.b16 %v716, %v708
        %v789 = vpack.c.b16 %v717, %v709
        %v790 = vpack.c.b16 %v726, %v718
        %v791 = vpack.c.b16 %v727, %v719
        %v792 = vpack.c.b16 %v728, %v720
        %v793 = vpack.c.b16 %v729, %v721
        %v794 = vpack.c.b16 %v730, %v722
        %v795 = vpack.c.b16 %v731, %v723
        %v796 = vpack.c.b16 %v732, %v724
        %v797 = vpack.c.b16 %v733, %v725
        %862 = vmatprep.subr.bf16.mxu0 %v735
        %863 = vmatpush1.bf16.msra.mxu0 %v734
        %864 = vmatprep.subr.bf16.mxu0 %v743
        %865 = vmatpush1.bf16.msra.mxu0 %v742
        %866 = vmatprep.subr.bf16.mxu0 %v751
        %867 = vmatpush1.bf16.msra.mxu0 %v750
        %868 = vmatprep.subr.bf16.mxu0 %v759
        %869 = vmatpush1.bf16.msra.mxu0 %v758
        %870 = vmatprep.subr.bf16.mxu0 %v767
        %871 = vmatpush1.bf16.msra.mxu0 %v766
        %872 = vmatprep.subr.bf16.mxu0 %v775
        %873 = vmatpush1.bf16.msra.mxu0 %v774
        %874 = vmatprep.subr.bf16.mxu0 %v783
        %875 = vmatpush1.bf16.msra.mxu0 %v782
        %876 = vmatprep.subr.bf16.mxu0 %v791
        %877 = vmatpush1.bf16.msra.mxu0 %v790
        %878 = vmatprep.subr.bf16.mxu0 0
        %879 = vmatpush1.bf16.msra.mxu0 0
        %880 = vmatprep.subr.bf16.mxu0 0
        %881 = vmatpush1.bf16.msra.mxu0 0
        %882 = vmatprep.subr.bf16.mxu0 0
        %883 = vmatpush1.bf16.msra.mxu0 0
        %884 = vmatprep.subr.bf16.mxu0 0
        %885 = vmatpush1.bf16.msra.mxu0 0
        %886 = vmatprep.subr.bf16.mxu0 0
        %887 = vmatpush1.bf16.msra.mxu0 0
        %888 = vmatprep.subr.bf16.mxu0 0
        %889 = vmatpush1.bf16.msra.mxu0 0
        %890 = vmatprep.subr.bf16.mxu0 0
        %891 = vmatpush1.bf16.msra.mxu0 0
        %892 = vmatprep.subr.bf16.mxu0 0
        %893 = vmatpush1.bf16.msra.mxu0 0
        %894 = vmatprep.mubr.bf16.mxu0 0
        %895 = vmatmul.mubr.bf16.gmra.mrb[0].mxu0 %v435
        %v896 = vpop.f32.mrb[0].mxu0
        %v897 = vadd.f32 %v505, %v896
        %v898 = vpop.f32.mrb[0].mxu0
        %v899 = vadd.f32 %v509, %v898
        %v900 = vpop.f32.mrb[0].mxu0
        %v901 = vadd.f32 %v505, %v900
        %v902 = vpop.f32.mrb[0].mxu0
        %v903 = vadd.f32 %v509, %v902
        %904 = vdwg.mxu0
        %905 = vmatprep.subr.bf16.mxu0 %v737
        %906 = vmatpush1.bf16.msra.mxu0 %v736
        %907 = vmatprep.subr.bf16.mxu0 %v745
        %908 = vmatpush1.bf16.msra.mxu0 %v744
        %909 = vmatprep.subr.bf16.mxu0 %v753
        %910 = vmatpush1.bf16.msra.mxu0 %v752
        %911 = vmatprep.subr.bf16.mxu0 %v761
        %912 = vmatpush1.bf16.msra.mxu0 %v760
        %913 = vmatprep.subr.bf16.mxu0 %v769
        %914 = vmatpush1.bf16.msra.mxu0 %v768
        %915 = vmatprep.subr.bf16.mxu0 %v777
        %916 = vmatpush1.bf16.msra.mxu0 %v776
        %917 = vmatprep.subr.bf16.mxu0 %v785
        %918 = vmatpush1.bf16.msra.mxu0 %v784
        %919 = vmatprep.subr.bf16.mxu0 %v793
        %920 = vmatpush1.bf16.msra.mxu0 %v792
        %921 = vmatprep.subr.bf16.mxu0 0
        %922 = vmatpush1.bf16.msra.mxu0 0
        %923 = vmatprep.subr.bf16.mxu0 0
        %924 = vmatpush1.bf16.msra.mxu0 0
        %925 = vmatprep.subr.bf16.mxu0 0
        %926 = vmatpush1.bf16.msra.mxu0 0
        %927 = vmatprep.subr.bf16.mxu0 0
        %928 = vmatpush1.bf16.msra.mxu0 0
        %929 = vmatprep.subr.bf16.mxu0 0
        %930 = vmatpush1.bf16.msra.mxu0 0
        %931 = vmatprep.subr.bf16.mxu0 0
        %932 = vmatpush1.bf16.msra.mxu0 0
        %933 = vmatprep.subr.bf16.mxu0 0
        %934 = vmatpush1.bf16.msra.mxu0 0
        %935 = vmatprep.subr.bf16.mxu0 0
        %936 = vmatpush1.bf16.msra.mxu0 0
        %937 = vmatprep.mubr.bf16.mxu0 0
        %938 = vmatmul.mubr.bf16.gmra.mrb[0].mxu0 %v435
        %v939 = vpop.f32.mrb[0].mxu0
        %v940 = vadd.f32 %v513, %v939
        %v941 = vpop.f32.mrb[0].mxu0
        %v942 = vadd.f32 %v517, %v941
        %v943 = vpop.f32.mrb[0].mxu0
        %v944 = vadd.f32 %v513, %v943
        %v945 = vpop.f32.mrb[0].mxu0
        %v946 = vadd.f32 %v517, %v945
        %947 = vdwg.mxu0
        %948 = vmatprep.subr.bf16.mxu0 %v739
        %949 = vmatpush1.bf16.msra.mxu0 %v738
        %950 = vmatprep.subr.bf16.mxu0 %v747
        %951 = vmatpush1.bf16.msra.mxu0 %v746
        %952 = vmatprep.subr.bf16.mxu0 %v755
        %953 = vmatpush1.bf16.msra.mxu0 %v754
        %954 = vmatprep.subr.bf16.mxu0 %v763
        %955 = vmatpush1.bf16.msra.mxu0 %v762
        %956 = vmatprep.subr.bf16.mxu0 %v771
        %957 = vmatpush1.bf16.msra.mxu0 %v770
        %958 = vmatprep.subr.bf16.mxu0 %v779
        %959 = vmatpush1.bf16.msra.mxu0 %v778
        %960 = vmatprep.subr.bf16.mxu0 %v787
        %961 = vmatpush1.bf16.msra.mxu0 %v786
        %962 = vmatprep.subr.bf16.mxu0 %v795
        %963 = vmatpush1.bf16.msra.mxu0 %v794
        %964 = vmatprep.subr.bf16.mxu0 0
        %965 = vmatpush1.bf16.msra.mxu0 0
        %966 = vmatprep.subr.bf16.mxu0 0
        %967 = vmatpush1.bf16.msra.mxu0 0
        %968 = vmatprep.subr.bf16.mxu0 0
        %969 = vmatpush1.bf16.msra.mxu0 0
        %970 = vmatprep.subr.bf16.mxu0 0
        %971 = vmatpush1.bf16.msra.mxu0 0
        %972 = vmatprep.subr.bf16.mxu0 0
        %973 = vmatpush1.bf16.msra.mxu0 0
        %974 = vmatprep.subr.bf16.mxu0 0
        %975 = vmatpush1.bf16.msra.mxu0 0
        %976 = vmatprep.subr.bf16.mxu0 0
        %977 = vmatpush1.bf16.msra.mxu0 0
        %978 = vmatprep.subr.bf16.mxu0 0
        %979 = vmatpush1.bf16.msra.mxu0 0
        %980 = vmatprep.mubr.bf16.mxu0 0
        %981 = vmatmul.mubr.bf16.gmra.mrb[0].mxu0 %v435
        %v982 = vpop.f32.mrb[0].mxu0
        %v983 = vadd.f32 %v521, %v982
        %v984 = vpop.f32.mrb[0].mxu0
        %v985 = vadd.f32 %v525, %v984
        %v986 = vpop.f32.mrb[0].mxu0
        %v987 = vadd.f32 %v521, %v986
        %v988 = vpop.f32.mrb[0].mxu0
        %v989 = vadd.f32 %v525, %v988
        %990 = vdwg.mxu0
        %991 = vmatprep.subr.bf16.mxu0 %v741
        %992 = vmatpush1.bf16.msra.mxu0 %v740
        %993 = vmatprep.subr.bf16.mxu0 %v749
        %994 = vmatpush1.bf16.msra.mxu0 %v748
        %995 = vmatprep.subr.bf16.mxu0 %v757
        %996 = vmatpush1.bf16.msra.mxu0 %v756
        %997 = vmatprep.subr.bf16.mxu0 %v765
        %998 = vmatpush1.bf16.msra.mxu0 %v764
        %999 = vmatprep.subr.bf16.mxu0 %v773
        %1000 = vmatpush1.bf16.msra.mxu0 %v772
        %1001 = vmatprep.subr.bf16.mxu0 %v781
        %1002 = vmatpush1.bf16.msra.mxu0 %v780
        %1003 = vmatprep.subr.bf16.mxu0 %v789
        %1004 = vmatpush1.bf16.msra.mxu0 %v788
        %1005 = vmatprep.subr.bf16.mxu0 %v797
        %1006 = vmatpush1.bf16.msra.mxu0 %v796
        %1007 = vmatprep.subr.bf16.mxu0 0
        %1008 = vmatpush1.bf16.msra.mxu0 0
        %1009 = vmatprep.subr.bf16.mxu0 0
        %1010 = vmatpush1.bf16.msra.mxu0 0
        %1011 = vmatprep.subr.bf16.mxu0 0
        %1012 = vmatpush1.bf16.msra.mxu0 0
        %1013 = vmatprep.subr.bf16.mxu0 0
        %1014 = vmatpush1.bf16.msra.mxu0 0
        %1015 = vmatprep.subr.bf16.mxu0 0
        %1016 = vmatpush1.bf16.msra.mxu0 0
        %1017 = vmatprep.subr.bf16.mxu0 0
        %1018 = vmatpush1.bf16.msra.mxu0 0
        %1019 = vmatprep.subr.bf16.mxu0 0
        %1020 = vmatpush1.bf16.msra.mxu0 0
        %1021 = vmatprep.subr.bf16.mxu0 0
        %1022 = vmatpush1.bf16.msra.mxu0 0
        %1023 = vmatprep.mubr.bf16.mxu0 0
        %1024 = vmatmul.mubr.bf16.gmra.mrb[0].mxu0 %v435
        %v1025 = vpop.f32.mrb[0].mxu0
        %v1026 = vadd.f32 %v529, %v1025
        %v1027 = vpop.f32.mrb[0].mxu0
        %v1028 = vadd.f32 %v533, %v1027
        %v1029 = vpop.f32.mrb[0].mxu0
        %v1030 = vadd.f32 %v529, %v1029
        %v1031 = vpop.f32.mrb[0].mxu0
        %v1032 = vadd.f32 %v533, %v1031
        %1033 = vdwg.mxu0
        %1034 = vst [vmem:[%s271] sm:$0xff] %v897
        %1035 = vst [vmem:[%s271 + $0x8] sm:$0xff] %v899
        %1036 = vst [vmem:[%s271 + $0x10] sm:$0xff] %v940
        %1037 = vst [vmem:[%s271 + $0x18] sm:$0xff] %v942
        %1038 = vst [vmem:[%s271 + $0x20] sm:$0xff] %v983
        %1039 = vst [vmem:[%s271 + $0x28] sm:$0xff] %v985
        %1040 = vst [vmem:[%s271 + $0x30] sm:$0xff] %v1026
        %1041 = vst [vmem:[%s271 + $0x38] sm:$0xff] %v1028
        %1042 = vst [vmem:[%s271 + $0x40] sm:$0xff] %v901
        %1043 = vst [vmem:[%s271 + $0x48] sm:$0xff] %v903
        %1044 = vst [vmem:[%s271 + $0x50] sm:$0xff] %v944
        %1045 = vst [vmem:[%s271 + $0x58] sm:$0xff] %v946
        %1046 = vst [vmem:[%s271 + $0x60] sm:$0xff] %v987
        %1047 = vst [vmem:[%s271 + $0x68] sm:$0xff] %v989
        %1048 = vst [vmem:[%s271 + $0x70] sm:$0xff] %v1030
        %1049 = vst [vmem:[%s271 + $0x78] sm:$0xff] %v1032
        %s1050 = sand.u32 %s141, 1
        %s1051 = scalar_lea.sflag [#allocation4], %s1050
        %s1052 = sand.u32 %s141, 1
        %s1053 = smul.addr %s1052, 128
        %s1054 = scalar_lea.vmem [#allocation8], %s1053
        // Predicated region
        $region53: #{tpu_custom_call.1} parent=39 // pred_check
          %p1055 = pneg %p151
        $region54: #{tpu_custom_call.1} parent=39 // pred_check_branch
          %1057 = sbr.rel (%p1055) target = $region56
        $region55: #{tpu_custom_call.1} parent=39 // pred_region
          %s1059 = ssub.s32 2048, 2048
          %1060 = vsyncadd %s1051, %s1059
          %s1061 = smul.addr %s23, 16
          %s1062 = smul.addr %s1061, 128
          %s1063 = scalar_lea.hbm %s5, %s1062
          %s1064 = sshll.u32 %s1054, 4
          %s1065 = int_to_ptr.vmem [resolvable:$true] %s1064
          %1070 = dma.vmem_to_hbm [thread:$0]  %s1065, 2048, %s1063, %s1051, 1024, 1024, 64
        $region56: #{tpu_custom_call.1} parent=39 // pred_fallthru
          _
      $region40: #{tpu_custom_call.1} parent=5 // pred_fallthru
        _
      %p1071 = scmp.le.s32.totalorder 2, %s18
      // Predicated region
      $region57: #{tpu_custom_call.1} parent=5 // pred_check
        %p1072 = pneg %p1071
      $region58: #{tpu_custom_call.1} parent=5 // pred_check_branch
        %1074 = sbr.rel (%p1072) target = $region60
      $region59: #{tpu_custom_call.1} parent=5 // pred_region
        %s1075 = ssub.s32 %s18, 2
        // Predicated region
        $region61: #{tpu_custom_call.1} parent=59 // pred_check
          %p1076 = pneg %p157
        $region62: #{tpu_custom_call.1} parent=59 // pred_check_branch
          %1078 = sbr.rel (%p1076) target = $region64
        $region63: #{tpu_custom_call.1} parent=59 // pred_region
          %s1079 = sand.u32 %s142, 1
          %s1080 = scalar_lea.sflag [#allocation4], %s1079
          %s1081 = sand.u32 %s142, 1
          %s1082 = smul.addr %s1081, 128
          %s1083 = scalar_lea.vmem [#allocation8], %s1082
          %1084 = dma.done %s1080, 2048
        $region64: #{tpu_custom_call.1} parent=59 // pred_fallthru
          _
      $region60: #{tpu_custom_call.1} parent=5 // pred_fallthru
        _
    $region6: #{tpu_custom_call.1} parent=1 // loop_footer
      %s22 = sadd.s32 1, %s18
    $region7: #{tpu_custom_call.1} parent=1 // loop_footer_branch
      %17 = sbr.rel target = $region3
    $region8: #{tpu_custom_call.1} parent=1 // loop_exit
      _
    %1085 = vsyncpa [#allocation3], 1
    %s1086 = scalar_lea.sflag [#allocation3], 1
    %1087 = vsyncpa %s1086, 1
    %1088 = vsyncpa [#allocation6], 1
    %1089 = vsyncpa [#allocation4], 1
    %s1090 = scalar_lea.sflag [#allocation4], 1
    %1091 = vsyncpa %s1090, 1

</llo_original>
